<compile_context>
chip_gen: v6e
topology: v6e:2x2x1
jax: 0.10.0
libtpu: 0.0.40
codegen_flags: <defaults>
</compile_context>

<pallas_src>
import functools

import jax
import jax.numpy as jnp
from jax.experimental import pallas as pl
from jax.experimental.pallas import tpu as pltpu


def _round_up(x, m):
    return (x + m - 1) // m * m


def _leaky_relu(x, slope=0.01):
    # torch.nn.LeakyReLU default negative_slope = 0.01
    return jnp.where(x > 0, x, slope * x)


def _store_row(out_ref, col):
    """Store a (tm, 1) f32 column lane-dense into the (1, 1, tm) output block."""
    row = jnp.transpose(col)                     # (1, tm) — cheap XLU relayout
    out_ref[...] = row.reshape(out_ref.shape).astype(out_ref.dtype)


# --------------------------------------------------------------------------- #
# Kernels
# --------------------------------------------------------------------------- #
def _expr_decoder_kernel_pred(x_ref, w1_ref, b1_ref, w2_ref, b2_ref,
                              w3_ref, b3_ref, pred_ref):
    cd = w1_ref.dtype
    x = x_ref[...].astype(cd)                    # f32 -> bf16 cast in-kernel
    h1 = _leaky_relu(
        jnp.dot(x, w1_ref[...], preferred_element_type=jnp.float32) + b1_ref[...])
    h2 = _leaky_relu(
        jnp.dot(h1.astype(cd), w2_ref[...], preferred_element_type=jnp.float32)
        + b2_ref[...])
    pred = jnp.sum(h2 * w3_ref[...], axis=-1, keepdims=True) + b3_ref[0]
    _store_row(pred_ref, pred)


def _expr_decoder_kernel_dual_split(x_ref, w1c_ref, b1c_ref,
                                    w2f_ref, b2f_ref, w2z_ref, b2z_ref,
                                    w3c_ref, b3_ref, pred_ref, zero_ref):
    cd = w1c_ref.dtype
    dp = w2f_ref.shape[0]
    x = x_ref[...].astype(cd)
    # fused layer-1 of both heads: one (tm, D) @ (D, 2dp) matmul.
    h1 = _leaky_relu(
        jnp.dot(x, w1c_ref[...], preferred_element_type=jnp.float32) + b1c_ref[...])
    h1f = h1[:, :dp].astype(cd)
    h1z = h1[:, dp:].astype(cd)
    h2f = _leaky_relu(
        jnp.dot(h1f, w2f_ref[...], preferred_element_type=jnp.float32) + b2f_ref[...])
    h2z = _leaky_relu(
        jnp.dot(h1z, w2z_ref[...], preferred_element_type=jnp.float32) + b2z_ref[...])
    w3 = w3c_ref[...]                                            # (2, dp) f32
    pred = jnp.sum(h2f * w3[0:1, :], axis=-1, keepdims=True) + b3_ref[0]
    zlog = jnp.sum(h2z * w3[1:2, :], axis=-1, keepdims=True) + b3_ref[1]
    _store_row(pred_ref, pred)
    _store_row(zero_ref, jax.nn.sigmoid(zlog))


def _expr_decoder_kernel_dual_blockdiag(x_ref, w1c_ref, b1c_ref,
                                        w2c_ref, b2c_ref,
                                        w3c_ref, b3_ref, pred_ref, zero_ref):
    cd = w1c_ref.dtype
    dp = w2c_ref.shape[0] // 2
    x = x_ref[...].astype(cd)
    # fused layer-1 (tm, D) @ (D, 2dp)
    h1 = _leaky_relu(
        jnp.dot(x, w1c_ref[...], preferred_element_type=jnp.float32) + b1c_ref[...])
    # fused layer-2: block-diagonal (2dp, 2dp) -> one 256-wide MXU pass.
    h2 = _leaky_relu(
        jnp.dot(h1.astype(cd), w2c_ref[...], preferred_element_type=jnp.float32)
        + b2c_ref[...])
    w3 = w3c_ref[...]                                            # (2, dp) f32
    pred = jnp.sum(h2[:, :dp] * w3[0:1, :], axis=-1, keepdims=True) + b3_ref[0]
    zlog = jnp.sum(h2[:, dp:] * w3[1:2, :], axis=-1, keepdims=True) + b3_ref[1]
    _store_row(pred_ref, pred)
    _store_row(zero_ref, jax.nn.sigmoid(zlog))


# --------------------------------------------------------------------------- #
# Specs / sizing helpers
# --------------------------------------------------------------------------- #
def _resident_spec(shape):
    """Fully-resident weight: constant index_map + single buffer (no double-buf)."""
    zeros = (0,) * len(shape)
    return pl.BlockSpec(shape, lambda *_: zeros, pipeline_mode=pl.Buffered(1))


def _device_kind():
    try:
        return jax.devices()[0].device_kind.lower()
    except Exception:
        return ""


def _vmem_cap_bytes():
    """Generation-aware usable VMEM cap (leave headroom for Mosaic scratch)."""
    try:
        phys = int(pltpu.get_tpu_info().vmem_capacity_bytes)
    except Exception:
        phys = 64 * 1024 * 1024          # conservative fallback (v7x physical)
    return min(phys - 8 * 1024 * 1024, 112 * 1024 * 1024)


def _estimate_vmem(tm, d, dp, n_heads, fuse_l2, wbytes, x_buffers):
    """VMEM estimate matching the actual buffering scheme."""
    h1_cols = dp * n_heads
    wb = d * h1_cols * wbytes                       # layer-1 weight(s), 1 buffer
    if n_heads == 1:
        wb += dp * dp * wbytes
    elif fuse_l2:
        wb += (2 * dp) * (2 * dp) * wbytes
    else:
        wb += 2 * dp * dp * wbytes
    wb += (2 * h1_cols + (n_heads + 2) * dp) * 4    # f32 biases + w3 rows
    xb = x_buffers * tm * d * 4                     # f32 x tiles (pipelined)
    ob = n_heads * 2 * tm * 4                       # output double buffers
    inter = (tm * h1_cols * (4 + 2)                 # h1 f32 + bf16 copy
             + tm * dp * n_heads * 4                # h2 per head (f32)
             + tm * dp * 4)                         # misc temps
    return wb + xb + ob + inter


# --------------------------------------------------------------------------- #
# One-time weight pre-pack (hoisted out of the per-call forward)
# --------------------------------------------------------------------------- #
def _prep_head(params, prefix, d, dp, compute_dtype):
    """Pad + transpose one head's PyTorch-convention weights.

    Only output columns are lane-padded to dp; layer-1 keeps K = d.
    """
    pad = dp - d
    w1 = jnp.pad(params[f"{prefix}.w1"].T, ((0, 0), (0, pad))).astype(compute_dtype)
    b1 = jnp.pad(params[f"{prefix}.b1"], (0, pad)).reshape(1, dp).astype(jnp.float32)
    w2 = jnp.pad(params[f"{prefix}.w2"].T, ((0, pad), (0, pad))).astype(compute_dtype)
    b2 = jnp.pad(params[f"{prefix}.b2"], (0, pad)).reshape(1, dp).astype(jnp.float32)
    w3 = jnp.pad(params[f"{prefix}.w3"].reshape(1, d),
                 ((0, 0), (0, pad))).astype(jnp.float32)          # (1, dp) row
    b3 = params[f"{prefix}.b3"].reshape(1).astype(jnp.float32)    # (1,)
    return w1, b1, w2, b2, w3, b3


def prepack_params(params, d_model, explicit_zero_prob, *,
                   compute_dtype=jnp.bfloat16, fuse_layer2=None):
    """Pad / transpose / concatenate weights once; returns device-resident dict."""
    dp = _round_up(max(d_model, 128), 128)
    if fuse_layer2 is None:
        kind = _device_kind()
        small_mxu = any(v in kind for v in ("v2", "v3", "v4", "v5"))
        fuse_layer2 = explicit_zero_prob and dp == 128 and not small_mxu

    if not explicit_zero_prob:
        w1, b1, w2, b2, w3, b3 = _prep_head(params, "fc", d_model, dp, compute_dtype)
        packed = dict(w1=w1, b1=b1, w2=w2, b2=b2, w3=w3, b3=b3)
        return jax.device_put(packed)

    w1f, b1f, w2f, b2f, w3f, b3f = _prep_head(params, "fc", d_model, dp,
                                              compute_dtype)
    w1z, b1z, w2z, b2z, w3z, b3z = _prep_head(params, "zero_logit", d_model, dp,
                                              compute_dtype)
    packed = dict(
        w1c=jnp.concatenate([w1f, w1z], axis=1),     # (d, 2dp) fused layer-1
        b1c=jnp.concatenate([b1f, b1z], axis=1),     # (1, 2dp)
        w3c=jnp.concatenate([w3f, w3z], axis=0),     # (2, dp)
        b3c=jnp.concatenate([b3f, b3z], axis=0),     # (2,) -> SMEM
    )
    if fuse_layer2:
        zero = jnp.zeros((dp, dp), compute_dtype)
        packed["w2c"] = jnp.concatenate(
            [jnp.concatenate([w2f, zero], axis=1),
             jnp.concatenate([zero, w2z], axis=1)], axis=0)       # (2dp, 2dp)
        packed["b2c"] = jnp.concatenate([b2f, b2z], axis=1)       # (1, 2dp)
    else:
        packed.update(w2f=w2f, b2f=b2f, w2z=w2z, b2z=b2z)
    return jax.device_put(packed)


# --------------------------------------------------------------------------- #
# Forward
# --------------------------------------------------------------------------- #
@functools.partial(jax.jit, static_argnames=("explicit_zero_prob", "tm"))
def expr_decoder_forward(x, packed, *, explicit_zero_prob=False, tm=None):
    """x: (B, S, D) float32.  packed: output of prepack_params()."""
    B, S, D = x.shape
    N = B * S
    n_heads = 2 if explicit_zero_prob else 1
    if explicit_zero_prob:
        dp = packed["w3c"].shape[1]
        wdtype = packed["w1c"].dtype
        fuse_l2 = "w2c" in packed
    else:
        dp = packed["w1"].shape[1]
        wdtype = packed["w1"].dtype
        fuse_l2 = False
    wbytes = jnp.dtype(wdtype).itemsize

    # ---- row-tile selection -------------------------------------------------
    if tm is None:
        tm = 1024 if dp * n_heads <= 512 else 512
    tm_eff = min(_round_up(tm, 16), _round_up(N, 16))
    # ensure >=2 tiles so the "parallel" axis can shard across TCs (v7x megacore)
    if N >= 128 and _round_up(N, tm_eff) // tm_eff == 1:
        half = _round_up((N + 1) // 2, 16)
        if half < tm_eff:
            tm_eff = half
    # shrink until the (margined) VMEM estimate fits this generation's cap
    cap = _vmem_cap_bytes()
    x_buf_est = 3 if D <= 256 else 2
    while tm_eff > 128 and _estimate_vmem(tm_eff, D, dp, n_heads, fuse_l2,
                                          wbytes, x_buf_est) * 1.5 > cap:
        tm_eff = max(128, _round_up(tm_eff // 2, 16))

    n_pad = _round_up(N, tm_eff)
    num_tiles = n_pad // tm_eff
    x_buffers = 3 if (D <= 256 and num_tiles >= 3) else 2
    est = _estimate_vmem(tm_eff, D, dp, n_heads, fuse_l2, wbytes, x_buffers)

    # x stays f32 and un-padded along D; only rows are padded to a tile multiple.
    x2d = jnp.pad(x.reshape(N, D), ((0, n_pad - N), (0, 0)))

    x_spec = pl.BlockSpec((tm_eff, D), lambda i: (i, 0),
                          pipeline_mode=pl.Buffered(x_buffers))
    out_spec = pl.BlockSpec((1, 1, tm_eff), lambda i: (i, 0, 0))
    smem_spec = pl.BlockSpec(memory_space=pltpu.MemorySpace.SMEM)
    out_sds = jax.ShapeDtypeStruct((num_tiles, 1, tm_eff), jnp.float32)
    grid = (num_tiles,)

    ckw = dict(dimension_semantics=("parallel",))
    if est * 1.5 > 12 * 1024 * 1024:     # above v5e's 16 MiB scoped default
        ckw["vmem_limit_bytes"] = int(min(max(est * 1.5, 32 * 1024 * 1024), cap))
    cparams = pltpu.CompilerParams(**ckw)

    if not explicit_zero_prob:
        pred = pl.pallas_call(
            _expr_decoder_kernel_pred,
            out_shape=out_sds,
            grid_spec=pltpu.PrefetchScalarGridSpec(
                num_scalar_prefetch=0, grid=grid,
                in_specs=[x_spec,
                          _resident_spec((D, dp)), _resident_spec((1, dp)),
                          _resident_spec((dp, dp)), _resident_spec((1, dp)),
                          _resident_spec((1, dp)), smem_spec],
                out_specs=out_spec),
            compiler_params=cparams,
        )(x2d, packed["w1"], packed["b1"], packed["w2"], packed["b2"],
          packed["w3"], packed["b3"])
        return dict(pred=pred.reshape(n_pad)[:N].reshape(B, S))

    if fuse_l2:
        pred, zero_probs = pl.pallas_call(
            _expr_decoder_kernel_dual_blockdiag,
            out_shape=(out_sds, out_sds),
            grid_spec=pltpu.PrefetchScalarGridSpec(
                num_scalar_prefetch=0, grid=grid,
                in_specs=[x_spec,
                          _resident_spec((D, 2 * dp)), _resident_spec((1, 2 * dp)),
                          _resident_spec((2 * dp, 2 * dp)),
                          _resident_spec((1, 2 * dp)),
                          _resident_spec((2, dp)), smem_spec],
                out_specs=[out_spec, out_spec]),
            compiler_params=cparams,
        )(x2d, packed["w1c"], packed["b1c"], packed["w2c"], packed["b2c"],
          packed["w3c"], packed["b3c"])
    else:
        pred, zero_probs = pl.pallas_call(
            _expr_decoder_kernel_dual_split,
            out_shape=(out_sds, out_sds),
            grid_spec=pltpu.PrefetchScalarGridSpec(
                num_scalar_prefetch=0, grid=grid,
                in_specs=[x_spec,
                          _resident_spec((D, 2 * dp)), _resident_spec((1, 2 * dp)),
                          _resident_spec((dp, dp)), _resident_spec((1, dp)),
                          _resident_spec((dp, dp)), _resident_spec((1, dp)),
                          _resident_spec((2, dp)), smem_spec],
                out_specs=[out_spec, out_spec]),
            compiler_params=cparams,
        )(x2d, packed["w1c"], packed["b1c"], packed["w2f"], packed["b2f"],
          packed["w2z"], packed["b2z"], packed["w3c"], packed["b3c"])

    return dict(pred=pred.reshape(n_pad)[:N].reshape(B, S),
                zero_probs=zero_probs.reshape(n_pad)[:N].reshape(B, S))


# --------------------------------------------------------------------------- #
# Synthetic params + pure-JAX reference + self-test
# --------------------------------------------------------------------------- #
def init_params(key, d_model, explicit_zero_prob):
    """Deterministic synthetic parameters in PyTorch (out, in) convention."""
    params = {}
    heads = ["fc"] + (["zero_logit"] if explicit_zero_prob else [])
    for h in heads:
        shapes = {
            "w1": (d_model, d_model), "b1": (d_model,),
            "w2": (d_model, d_model), "b2": (d_model,),
            "w3": (1, d_model),       "b3": (1,),
        }
        for name, shp in shapes.items():
            key, sub = jax.random.split(key)
            params[f"{h}.{name}"] = 0.05 * jax.random.normal(sub, shp, jnp.float32)
    return params


def _reference(x, params, explicit_zero_prob):
    """Pure-JAX f32 reference mirroring the PyTorch module."""
    def head(x3d, p):
        h = _leaky_relu(x3d @ params[f"{p}.w1"].T + params[f"{p}.b1"])
        h = _leaky_relu(h @ params[f"{p}.w2"].T + params[f"{p}.b2"])
        return (h @ params[f"{p}.w3"].T + params[f"{p}.b3"])[..., 0]
    out = dict(pred=head(x, "fc"))
    if explicit_zero_prob:
        out["zero_probs"] = jax.nn.sigmoid(head(x, "zero_logit"))
    return out


if __name__ == "__main__":
    B, S, D = 2, 8, 32

    key = jax.random.PRNGKey(0)
    kx, kp = jax.random.split(key)
    x = jax.random.normal(kx, (B, S, D), jnp.float32)
    params = init_params(kp, D, explicit_zero_prob=True)
    ref = _reference(x, params, True)

    # one-time weight pre-pack (pad / transpose / concat hoisted out of forward)
    packed_dual = prepack_params(params, D, explicit_zero_prob=True)
    packed_single = prepack_params(params, D, explicit_zero_prob=False)

    # explicit_zero_prob=True path (dual head, fused layer-1, layer-2 fused on >=v6e)
    out = expr_decoder_forward(x, packed_dual, explicit_zero_prob=True)
    jax.block_until_ready(out)
    assert out["pred"].shape == (B, S)
    assert out["zero_probs"].shape == (B, S)
    # bf16 MXU inputs -> loosened tolerances vs the f32 reference.
    assert jnp.allclose(out["pred"], ref["pred"], atol=2e-2, rtol=2e-2)
    assert jnp.allclose(out["zero_probs"], ref["zero_probs"], atol=2e-2, rtol=2e-2)

    # explicit_zero_prob=False path (single head)
    out1 = expr_decoder_forward(x, packed_single, explicit_zero_prob=False)
    jax.block_until_ready(out1)
    assert out1["pred"].shape == (B, S)
    assert jnp.allclose(out1["pred"], ref["pred"], atol=2e-2, rtol=2e-2)

    print("KERNEL_OK")
</pallas_src>

<mosaic_0001>
module attributes {stable_mosaic.version = 11 : i64} {
  func.func @_expr_decoder_kernel_dual_blockdiag(%arg0: i32, %arg1: memref<16x32xf32, #tpu.memory_space<vmem>>, %arg2: memref<32x256xbf16, #tpu.memory_space<vmem>>, %arg3: memref<1x256xf32, #tpu.memory_space<vmem>>, %arg4: memref<256x256xbf16, #tpu.memory_space<vmem>>, %arg5: memref<1x256xf32, #tpu.memory_space<vmem>>, %arg6: memref<2x128xf32, #tpu.memory_space<vmem>>, %arg7: memref<2xf32, #tpu.memory_space<smem>>, %arg8: memref<1x1x16xf32, #tpu.memory_space<vmem>>, %arg9: memref<1x1x16xf32, #tpu.memory_space<vmem>>) attributes {dimension_semantics = [#tpu.dimension_semantics<parallel>], iteration_bounds = array<i64: 1>, scalar_prefetch = 0 : i64, scratch_operands = 0 : i64, tpu.core_type = #tpu.core_type<tc>, window_params = [{pipeline_mode = #tpu.pipeline_mode<double_buffered>, transform_indices = @transform_0, window_bounds = array<i64: 16, 32>}, {pipeline_mode = #tpu.pipeline_mode<synchronous>, transform_indices = @transform_1, window_bounds = array<i64: 32, 256>}, {pipeline_mode = #tpu.pipeline_mode<synchronous>, transform_indices = @transform_2, window_bounds = array<i64: 1, 256>}, {pipeline_mode = #tpu.pipeline_mode<synchronous>, transform_indices = @transform_3, window_bounds = array<i64: 256, 256>}, {pipeline_mode = #tpu.pipeline_mode<synchronous>, transform_indices = @transform_4, window_bounds = array<i64: 1, 256>}, {pipeline_mode = #tpu.pipeline_mode<synchronous>, transform_indices = @transform_5, window_bounds = array<i64: 2, 128>}, {transform_indices = @transform_6, window_bounds = array<i64: 2>}, {transform_indices = @transform_7, window_bounds = array<i64: 1, 1, 16>}, {transform_indices = @transform_8, window_bounds = array<i64: 1, 1, 16>}]} {
    %c0 = arith.constant 0 : index
    %c0_0 = arith.constant 0 : index
    %0 = vector.load %arg1[%c0, %c0_0] : memref<16x32xf32, #tpu.memory_space<vmem>>, vector<16x32xf32>
    %1 = arith.truncf %0 : vector<16x32xf32> to vector<16x32xbf16>
    %c0_1 = arith.constant 0 : index
    %c0_2 = arith.constant 0 : index
    %2 = vector.load %arg2[%c0_1, %c0_2] : memref<32x256xbf16, #tpu.memory_space<vmem>>, vector<32x256xbf16>
    %cst = arith.constant dense<0.000000e+00> : vector<16x256xf32>
    %3 = tpu.matmul %1, %2, %cst {dimension_numbers = #tpu.dot_dimension_numbers<[1], [0], [0], [1], [0, 0, 1, 1], [], []>} : vector<16x32xbf16>, vector<32x256xbf16>, vector<16x256xf32> -> vector<16x256xf32>
    %c0_3 = arith.constant 0 : index
    %c0_4 = arith.constant 0 : index
    %4 = vector.load %arg3[%c0_3, %c0_4] : memref<1x256xf32, #tpu.memory_space<vmem>>, vector<1x256xf32>
    %5 = vector.broadcast %4 : vector<1x256xf32> to vector<16x256xf32>
    %6 = arith.addf %3, %5 : vector<16x256xf32>
    %cst_5 = arith.constant 0.000000e+00 : f32
    %7 = vector.broadcast %cst_5 : f32 to vector<16x256xf32>
    %8 = arith.cmpf ogt, %6, %7 : vector<16x256xf32>
    %cst_6 = arith.constant 0.00999999977 : f32
    %9 = vector.broadcast %cst_6 : f32 to vector<16x256xf32>
    %10 = arith.mulf %9, %6 : vector<16x256xf32>
    %11 = arith.select %8, %6, %10 : vector<16x256xi1>, vector<16x256xf32>
    %12 = arith.truncf %11 : vector<16x256xf32> to vector<16x256xbf16>
    %c0_7 = arith.constant 0 : index
    %c0_8 = arith.constant 0 : index
    %13 = vector.load %arg4[%c0_7, %c0_8] : memref<256x256xbf16, #tpu.memory_space<vmem>>, vector<256x256xbf16>
    %cst_9 = arith.constant dense<0.000000e+00> : vector<16x256xf32>
    %14 = tpu.matmul %12, %13, %cst_9 {dimension_numbers = #tpu.dot_dimension_numbers<[1], [0], [0], [1], [0, 0, 1, 1], [], []>} : vector<16x256xbf16>, vector<256x256xbf16>, vector<16x256xf32> -> vector<16x256xf32>
    %c0_10 = arith.constant 0 : index
    %c0_11 = arith.constant 0 : index
    %15 = vector.load %arg5[%c0_10, %c0_11] : memref<1x256xf32, #tpu.memory_space<vmem>>, vector<1x256xf32>
    %16 = vector.broadcast %15 : vector<1x256xf32> to vector<16x256xf32>
    %17 = arith.addf %14, %16 : vector<16x256xf32>
    %cst_12 = arith.constant 0.000000e+00 : f32
    %18 = vector.broadcast %cst_12 : f32 to vector<16x256xf32>
    %19 = arith.cmpf ogt, %17, %18 : vector<16x256xf32>
    %cst_13 = arith.constant 0.00999999977 : f32
    %20 = vector.broadcast %cst_13 : f32 to vector<16x256xf32>
    %21 = arith.mulf %20, %17 : vector<16x256xf32>
    %22 = arith.select %19, %17, %21 : vector<16x256xi1>, vector<16x256xf32>
    %c0_14 = arith.constant 0 : index
    %c0_15 = arith.constant 0 : index
    %23 = vector.load %arg6[%c0_14, %c0_15] : memref<2x128xf32, #tpu.memory_space<vmem>>, vector<2x128xf32>
    %24 = vector.extract_strided_slice %22 {offsets = [0, 0], sizes = [16, 128], strides = [1, 1]} : vector<16x256xf32> to vector<16x128xf32>
    %25 = vector.extract_strided_slice %23 {offsets = [0, 0], sizes = [1, 128], strides = [1, 1]} : vector<2x128xf32> to vector<1x128xf32>
    %26 = vector.broadcast %25 : vector<1x128xf32> to vector<16x128xf32>
    %27 = arith.mulf %24, %26 : vector<16x128xf32>
    %cst_16 = arith.constant dense<0.000000e+00> : vector<16xf32>
    %28 = vector.multi_reduction <add>, %27, %cst_16 [1] : vector<16x128xf32> to vector<16xf32>
    %29 = vector.shape_cast %28 : vector<16xf32> to vector<16x1xf32>
    %c0_17 = arith.constant 0 : index
    %30 = memref.load %arg7[%c0_17] : memref<2xf32, #tpu.memory_space<smem>>
    %31 = vector.broadcast %30 : f32 to vector<16x1xf32>
    %32 = arith.addf %29, %31 : vector<16x1xf32>
    %33 = vector.extract_strided_slice %22 {offsets = [0, 128], sizes = [16, 128], strides = [1, 1]} : vector<16x256xf32> to vector<16x128xf32>
    %34 = vector.extract_strided_slice %23 {offsets = [1, 0], sizes = [1, 128], strides = [1, 1]} : vector<2x128xf32> to vector<1x128xf32>
    %35 = vector.broadcast %34 : vector<1x128xf32> to vector<16x128xf32>
    %36 = arith.mulf %33, %35 : vector<16x128xf32>
    %cst_18 = arith.constant dense<0.000000e+00> : vector<16xf32>
    %37 = vector.multi_reduction <add>, %36, %cst_18 [1] : vector<16x128xf32> to vector<16xf32>
    %38 = vector.shape_cast %37 : vector<16xf32> to vector<16x1xf32>
    %c1 = arith.constant 1 : index
    %39 = memref.load %arg7[%c1] : memref<2xf32, #tpu.memory_space<smem>>
    %40 = vector.broadcast %39 : f32 to vector<16x1xf32>
    %41 = arith.addf %38, %40 : vector<16x1xf32>
    %42 = tpu.transpose %32, [1, 0] : vector<16x1xf32> -> vector<1x16xf32>
    %43 = vector.shape_cast %42 : vector<1x16xf32> to vector<1x1x16xf32>
    %c0_19 = arith.constant 0 : index
    %c0_20 = arith.constant 0 : index
    %c0_21 = arith.constant 0 : index
    %44 = vector.load %arg8[%c0_19, %c0_20, %c0_21] : memref<1x1x16xf32, #tpu.memory_space<vmem>>, vector<1x1x16xf32>
    tpu.vector_store %arg8[%c0_19, %c0_20, %c0_21], %43 {strides = array<i32>} : memref<1x1x16xf32, #tpu.memory_space<vmem>>, vector<1x1x16xf32>,
    %45 = arith.negf %41 : vector<16x1xf32>
    %46 = math.exp %45 : vector<16x1xf32>
    %cst_22 = arith.constant 1.000000e+00 : f32
    %47 = vector.broadcast %cst_22 : f32 to vector<16x1xf32>
    %48 = arith.addf %47, %46 : vector<16x1xf32>
    %49 = arith.divf %47, %48 : vector<16x1xf32>
    %50 = tpu.transpose %49, [1, 0] : vector<16x1xf32> -> vector<1x16xf32>
    %51 = vector.shape_cast %50 : vector<1x16xf32> to vector<1x1x16xf32>
    %c0_23 = arith.constant 0 : index
    %c0_24 = arith.constant 0 : index
    %c0_25 = arith.constant 0 : index
    %52 = vector.load %arg9[%c0_23, %c0_24, %c0_25] : memref<1x1x16xf32, #tpu.memory_space<vmem>>, vector<1x1x16xf32>
    tpu.vector_store %arg9[%c0_23, %c0_24, %c0_25], %51 {strides = array<i32>} : memref<1x1x16xf32, #tpu.memory_space<vmem>>, vector<1x1x16xf32>,
    return
  }
  func.func @transform_0(%arg0: i32) -> (i32, i32) {
    %c0_i32 = arith.constant 0 : i32
    %c0_i32_0 = arith.constant 0 : i32
    return %arg0, %c0_i32 : i32, i32
  }
  func.func @transform_1(%arg0: i32) -> (i32, i32) {
    %c0_i32 = arith.constant 0 : i32
    %c0_i32_0 = arith.constant 0 : i32
    %c0_i32_1 = arith.constant 0 : i32
    return %c0_i32, %c0_i32_0 : i32, i32
  }
  func.func @transform_2(%arg0: i32) -> (i32, i32) {
    %c0_i32 = arith.constant 0 : i32
    %c0_i32_0 = arith.constant 0 : i32
    %c0_i32_1 = arith.constant 0 : i32
    return %c0_i32, %c0_i32_0 : i32, i32
  }
  func.func @transform_3(%arg0: i32) -> (i32, i32) {
    %c0_i32 = arith.constant 0 : i32
    %c0_i32_0 = arith.constant 0 : i32
    %c0_i32_1 = arith.constant 0 : i32
    return %c0_i32, %c0_i32_0 : i32, i32
  }
  func.func @transform_4(%arg0: i32) -> (i32, i32) {
    %c0_i32 = arith.constant 0 : i32
    %c0_i32_0 = arith.constant 0 : i32
    %c0_i32_1 = arith.constant 0 : i32
    return %c0_i32, %c0_i32_0 : i32, i32
  }
  func.func @transform_5(%arg0: i32) -> (i32, i32) {
    %c0_i32 = arith.constant 0 : i32
    %c0_i32_0 = arith.constant 0 : i32
    %c0_i32_1 = arith.constant 0 : i32
    return %c0_i32, %c0_i32_0 : i32, i32
  }
  func.func @transform_6(%arg0: i32) -> i32 {
    %c0_i32 = arith.constant 0 : i32
    %c0_i32_0 = arith.constant 0 : i32
    return %c0_i32 : i32
  }
  func.func @transform_7(%arg0: i32) -> (i32, i32, i32) {
    %c0_i32 = arith.constant 0 : i32
    %c0_i32_0 = arith.constant 0 : i32
    %c0_i32_1 = arith.constant 0 : i32
    return %arg0, %c0_i32, %c0_i32_0 : i32, i32, i32
  }
  func.func @transform_8(%arg0: i32) -> (i32, i32, i32) {
    %c0_i32 = arith.constant 0 : i32
    %c0_i32_0 = arith.constant 0 : i32
    %c0_i32_1 = arith.constant 0 : i32
    return %arg0, %c0_i32, %c0_i32_0 : i32, i32, i32
  }
}

</mosaic_0001>

<llo_original>
// kernel: expr_decoder_forward.1
$region0: #{expr_decoder_forward.1}
  #allocation0 [shape = 'u32[]', space=smem, size = 0x4, offset = 0x4, fixed_abs, tag = 'smem constant byte address 0x4 - core index']
  #allocation1 [shape = 'u32[144,128]{1,0:T(1,128)}', space=vmem, size = 0x12000, scoped, tag = 'internal scratch']
  %s0 = inlined_call_operand.hbm [shape: f32[16,32], index: 0, kind: input, shape index: {}]
  %s1 = inlined_call_operand.hbm [shape: bf16[32,256], index: 1, kind: input, shape index: {}]
  %s2 = inlined_call_operand.vmem [shape: f32[1,256], index: 2, kind: input, shape index: {}]
  %s3 = inlined_call_operand.hbm [shape: bf16[256,256], index: 3, kind: input, shape index: {}]
  %s4 = inlined_call_operand.vmem [shape: f32[1,256], index: 4, kind: input, shape index: {}]
  %s5 = inlined_call_operand.vmem [shape: f32[2,128], index: 5, kind: input, shape index: {}]
  %s6 = inlined_call_operand.vmem [shape: f32[2], index: 6, kind: input, shape index: {}]
  %s7 = inlined_call_operand.vmem [shape: f32[1,1,16], index: 7, kind: output, shape index: {0}]
  %s8 = inlined_call_operand.vmem [shape: f32[1,1,16], index: 8, kind: output, shape index: {1}]
  %9 = xla_tuple %s7, %s8
  %s10 = sld [smem:[#allocation0]]
  $region62: #{expr_decoder_forward.1} parent=0
    _
  %s12 = ssub.s32 1, %s10
  %s13 = scalar_select 0, %s12, %s10
  $region1: #{expr_decoder_forward.1} parent=0
    #allocation2 [shape = 'u8[8192]{0}', space=vmem, size = 0x2000, scoped, tag = 'input window, operand 0, single buffered']
    #allocation3 [shape = 's32[1]{0}', space=sflag, size = 0x4, scoped, tag = 'scoped memory for expr_decoder_forward.1']
    #allocation4 [shape = 's32[1]{0}', space=sflag, size = 0x4, scoped, tag = 'scoped memory for expr_decoder_forward.1']
    #allocation5 [shape = 'u8[16384]{0}', space=vmem, size = 0x4000, scoped, tag = 'input window, operand 1, single buffered']
    #allocation6 [shape = 's32[1]{0}', space=sflag, size = 0x4, scoped, tag = 'scoped memory for expr_decoder_forward.1']
    #allocation7 [shape = 'u8[131072]{0}', space=vmem, size = 0x20000, scoped, tag = 'input window, operand 3, single buffered']
    #allocation8 [shape = 'u8[512]{0}', space=smem, size = 0x200, scoped, tag = 'input window, operand 6, single buffered']
    %14 = vsyncpa [#allocation3], 0
    %15 = vsyncpa [#allocation6], 0
    %16 = vsyncpa [#allocation4], 0
    // Predicated region
    $region2: #{expr_decoder_forward.1} parent=1 // pred_check
      _
    $region3: #{expr_decoder_forward.1} parent=1 // pred_check_branch
      %18 = sbr.rel (0) target = $region5
    $region4: #{expr_decoder_forward.1} parent=1 // pred_region
      %s20 = ssub.s32 256, 256
      %21 = vsyncadd [#allocation3], %s20
      %s22 = sshll.u32 [#allocation2], 4
      %s23 = int_to_ptr.vmem [resolvable:$true] %s22
      %28 = dma.hbm_to_vmem [thread:$0]  %s0, 256, %s23, [#allocation3], 128, 128, 8
    $region5: #{expr_decoder_forward.1} parent=1 // pred_fallthru
      _
    // Predicated region
    $region6: #{expr_decoder_forward.1} parent=1 // pred_check
      _
    $region7: #{expr_decoder_forward.1} parent=1 // pred_check_branch
      %30 = sbr.rel (0) target = $region9
    $region8: #{expr_decoder_forward.1} parent=1 // pred_region
      %s32 = ssub.s32 512, 512
      %33 = vsyncadd [#allocation6], %s32
      %s34 = sshll.u32 [#allocation5], 4
      %s35 = int_to_ptr.vmem [resolvable:$true] %s34
      %40 = dma.hbm_to_vmem [thread:$0]  %s1, 512, %s35, [#allocation6], 128, 128, 8
    $region9: #{expr_decoder_forward.1} parent=1 // pred_fallthru
      _
    // Predicated region
    $region10: #{expr_decoder_forward.1} parent=1 // pred_check
      _
    $region11: #{expr_decoder_forward.1} parent=1 // pred_check_branch
      %42 = sbr.rel (0) target = $region13
    $region12: #{expr_decoder_forward.1} parent=1 // pred_region
      _
    $region13: #{expr_decoder_forward.1} parent=1 // pred_fallthru
      _
    // Predicated region
    $region14: #{expr_decoder_forward.1} parent=1 // pred_check
      _
    $region15: #{expr_decoder_forward.1} parent=1 // pred_check_branch
      %44 = sbr.rel (0) target = $region17
    $region16: #{expr_decoder_forward.1} parent=1 // pred_region
      %s46 = ssub.s32 4096, 4096
      %47 = vsyncadd [#allocation6], %s46
      %s48 = sshll.u32 [#allocation7], 4
      %s49 = int_to_ptr.vmem [resolvable:$true] %s48
      %54 = dma.hbm_to_vmem [thread:$0]  %s3, 4096, %s49, [#allocation6], 128, 128, 8
    $region17: #{expr_decoder_forward.1} parent=1 // pred_fallthru
      _
    // Predicated region
    $region18: #{expr_decoder_forward.1} parent=1 // pred_check
      _
    $region19: #{expr_decoder_forward.1} parent=1 // pred_check_branch
      %56 = sbr.rel (0) target = $region21
    $region20: #{expr_decoder_forward.1} parent=1 // pred_region
      _
    $region21: #{expr_decoder_forward.1} parent=1 // pred_fallthru
      _
    // Predicated region
    $region22: #{expr_decoder_forward.1} parent=1 // pred_check
      _
    $region23: #{expr_decoder_forward.1} parent=1 // pred_check_branch
      %58 = sbr.rel (0) target = $region25
    $region24: #{expr_decoder_forward.1} parent=1 // pred_region
      _
    $region25: #{expr_decoder_forward.1} parent=1 // pred_fallthru
      _
    // Predicated region
    $region26: #{expr_decoder_forward.1} parent=1 // pred_check
      _
    $region27: #{expr_decoder_forward.1} parent=1 // pred_check_branch
      %60 = sbr.rel (0) target = $region29
    $region28: #{expr_decoder_forward.1} parent=1 // pred_region
      %s62 = ssub.s32 16, 16
      %63 = vsyncadd [#allocation4], %s62
      %s65 = sshll.u32 %s6, 4
      %s66 = int_to_ptr.vmem [resolvable:$true] %s65
      %68 = dma.vmem_to_smem %s66, 16, [#allocation8], [#allocation4]
    $region29: #{expr_decoder_forward.1} parent=1 // pred_fallthru
      _
    // Predicated region
    $region30: #{expr_decoder_forward.1} parent=1 // pred_check
      _
    $region31: #{expr_decoder_forward.1} parent=1 // pred_check_branch
      %70 = sbr.rel (0) target = $region33
    $region32: #{expr_decoder_forward.1} parent=1 // pred_region
      %71 = dma.done [#allocation3], 256
    $region33: #{expr_decoder_forward.1} parent=1 // pred_fallthru
      _
    // Predicated region
    $region34: #{expr_decoder_forward.1} parent=1 // pred_check
      _
    $region35: #{expr_decoder_forward.1} parent=1 // pred_check_branch
      %73 = sbr.rel (0) target = $region37
    $region36: #{expr_decoder_forward.1} parent=1 // pred_region
      %74 = dma.done [#allocation6], 512
    $region37: #{expr_decoder_forward.1} parent=1 // pred_fallthru
      _
    // Predicated region
    $region38: #{expr_decoder_forward.1} parent=1 // pred_check
      _
    $region39: #{expr_decoder_forward.1} parent=1 // pred_check_branch
      %76 = sbr.rel (0) target = $region41
    $region40: #{expr_decoder_forward.1} parent=1 // pred_region
      %77 = dma.done [#allocation6], 4096
    $region41: #{expr_decoder_forward.1} parent=1 // pred_fallthru
      _
    // Predicated region
    $region42: #{expr_decoder_forward.1} parent=1 // pred_check
      _
    $region43: #{expr_decoder_forward.1} parent=1 // pred_check_branch
      %79 = sbr.rel (0) target = $region45
    $region44: #{expr_decoder_forward.1} parent=1 // pred_region
      %80 = dma.done [#allocation4], 16
    $region45: #{expr_decoder_forward.1} parent=1 // pred_fallthru
      _
    %81 = sfence
    %v83 = vld [vmem:[#allocation2] sm:$0xff]
    %v84 = vld [vmem:[#allocation2 + $0x8] sm:$0xff]
    %v85 = vpack.c.bf16 %v84, %v83
    %v86 = vld [vmem:[#allocation5] sm:$0xff]
    %v87 = vld [vmem:[#allocation5 + $0x8] sm:$0xff]
    %v88 = vld [vmem:[#allocation5 + $0x10] sm:$0xff]
    %v89 = vld [vmem:[#allocation5 + $0x18] sm:$0xff]
    %v90 = vld [vmem:[%s2] sm:$0x3]
    %v92 = vlaneseq
    %v93 = vshrl.u32 %v92, 7
    %v94 = vsub.s32 0, %v93
    %v95 = vrot.slane %v90, %v94
    %v96 = vlaneseq
    %v97 = vshrl.u32 %v96, 7
    %v98 = vsub.s32 1, %v97
    %v99 = vrot.slane %v90, %v98
    %v106 = vunpack.c.l.b16 %v86
    %v107 = vunpack.c.h.b16 %v86
    %v108 = vunpack.c.l.b16 %v87
    %v109 = vunpack.c.h.b16 %v87
    %v110 = vunpack.c.l.b16 %v88
    %v111 = vunpack.c.h.b16 %v88
    %v112 = vunpack.c.l.b16 %v89
    %v113 = vunpack.c.h.b16 %v89
    %v114 = vpack.c.b16 %v108, %v106
    %v115 = vpack.c.b16 %v109, %v107
    %v116 = vpack.c.b16 %v112, %v110
    %v117 = vpack.c.b16 %v113, %v111
    %vm122 = vcmask 261120
    %v124 = vsel %vm122, %v85, 0
    %126 = vmatprep.subr.bf16.mxu0 0
    %127 = vmatpush1.bf16.msra.mxu0 0
    %128 = vmatprep.subr.bf16.mxu0 0
    %129 = vmatpush1.bf16.msra.mxu0 0
    %130 = vmatprep.subr.bf16.mxu0 0
    %131 = vmatpush1.bf16.msra.mxu0 0
    %132 = vmatprep.subr.bf16.mxu0 0
    %133 = vmatpush1.bf16.msra.mxu0 0
    %134 = vmatprep.subr.bf16.mxu0 0
    %135 = vmatpush1.bf16.msra.mxu0 0
    %136 = vmatprep.subr.bf16.mxu0 0
    %137 = vmatpush1.bf16.msra.mxu0 0
    %138 = vmatprep.subr.bf16.mxu0 %v117
    %139 = vmatpush1.bf16.msra.mxu0 %v116
    %140 = vmatprep.subr.bf16.mxu0 %v115
    %141 = vmatpush1.bf16.msra.mxu0 %v114
    %142 = vmatprep.subr.bf16.mxu0 0
    %143 = vmatpush2.bf16.msra.mxu0 0
    %144 = vmatprep.subr.bf16.mxu0 0
    %145 = vmatpush2.bf16.msra.mxu0 0
    %146 = vmatprep.subr.bf16.mxu0 0
    %147 = vmatpush2.bf16.msra.mxu0 0
    %148 = vmatprep.subr.bf16.mxu0 0
    %149 = vmatpush2.bf16.msra.mxu0 0
    %150 = vmatprep.subr.bf16.mxu0 0
    %151 = vmatpush2.bf16.msra.mxu0 0
    %152 = vmatprep.subr.bf16.mxu0 0
    %153 = vmatpush2.bf16.msra.mxu0 0
    %154 = vmatprep.subr.bf16.mxu0 0
    %155 = vmatpush2.bf16.msra.mxu0 0
    %156 = vmatprep.subr.bf16.mxu0 0
    %157 = vmatpush2.bf16.msra.mxu0 0
    %158 = vmatprep.mubr.bf16.mxu0 0
    %159 = vmatmul.mubr.bf16.gmra.mxu0 %v124
    %v160 = vpop.f32.mrf.mxu0
    %v161 = vadd.f32 %v95, %v160
    %v162 = vpop.f32.mrf.mxu0
    %v163 = vadd.f32 %v99, %v162
    %v164 = vpop.f32.mrf.mxu0
    %v165 = vadd.f32 %v95, %v164
    %v166 = vpop.f32.mrf.mxu0
    %v167 = vadd.f32 %v99, %v166
    %168 = vdwg.mxu0
    %vm169 = vcmp.gt.f32.partialorder %v161, 0.0
    %vm170 = vcmp.gt.f32.partialorder %v163, 0.0
    %vm171 = vcmp.gt.f32.partialorder %v165, 0.0
    %vm172 = vcmp.gt.f32.partialorder %v167, 0.0
    %v173 = vmul.f32 %v161, 0.01
    %v174 = vmul.f32 %v163, 0.01
    %v175 = vmul.f32 %v165, 0.01
    %v176 = vmul.f32 %v167, 0.01
    %v177 = vsel %vm169, %v161, %v173
    %v178 = vsel %vm170, %v163, %v174
    %v179 = vsel %vm171, %v165, %v175
    %v180 = vsel %vm172, %v167, %v176
    %v181 = vpack.c.bf16 %v179, %v177
    %v182 = vpack.c.bf16 %v180, %v178
    %v183 = vld [vmem:[#allocation7] sm:$0xff]
    %v184 = vld [vmem:[#allocation7 + $0x8] sm:$0xff]
    %v185 = vld [vmem:[#allocation7 + $0x10] sm:$0xff]
    %v186 = vld [vmem:[#allocation7 + $0x18] sm:$0xff]
    %v187 = vld [vmem:[#allocation7 + $0x20] sm:$0xff]
    %v188 = vld [vmem:[#allocation7 + $0x28] sm:$0xff]
    %v189 = vld [vmem:[#allocation7 + $0x30] sm:$0xff]
    %v190 = vld [vmem:[#allocation7 + $0x38] sm:$0xff]
    %v191 = vld [vmem:[#allocation7 + $0x40] sm:$0xff]
    %v192 = vld [vmem:[#allocation7 + $0x48] sm:$0xff]
    %v193 = vld [vmem:[#allocation7 + $0x50] sm:$0xff]
    %v194 = vld [vmem:[#allocation7 + $0x58] sm:$0xff]
    %v195 = vld [vmem:[#allocation7 + $0x60] sm:$0xff]
    %v196 = vld [vmem:[#allocation7 + $0x68] sm:$0xff]
    %v197 = vld [vmem:[#allocation7 + $0x70] sm:$0xff]
    %v198 = vld [vmem:[#allocation7 + $0x78] sm:$0xff]
    %v199 = vld [vmem:[#allocation7 + $0x80] sm:$0xff]
    %v200 = vld [vmem:[#allocation7 + $0x88] sm:$0xff]
    %v201 = vld [vmem:[#allocation7 + $0x90] sm:$0xff]
    %v202 = vld [vmem:[#allocation7 + $0x98] sm:$0xff]
    %v203 = vld [vmem:[#allocation7 + $0xa0] sm:$0xff]
    %v204 = vld [vmem:[#allocation7 + $0xa8] sm:$0xff]
    %v205 = vld [vmem:[#allocation7 + $0xb0] sm:$0xff]
    %v206 = vld [vmem:[#allocation7 + $0xb8] sm:$0xff]
    %v207 = vld [vmem:[#allocation7 + $0xc0] sm:$0xff]
    %v208 = vld [vmem:[#allocation7 + $0xc8] sm:$0xff]
    %v209 = vld [vmem:[#allocation7 + $0xd0] sm:$0xff]
    %v210 = vld [vmem:[#allocation7 + $0xd8] sm:$0xff]
    %v211 = vld [vmem:[#allocation7 + $0xe0] sm:$0xff]
    %v212 = vld [vmem:[#allocation7 + $0xe8] sm:$0xff]
    %v213 = vld [vmem:[#allocation7 + $0xf0] sm:$0xff]
    %v214 = vld [vmem:[#allocation7 + $0xf8] sm:$0xff]
    %v215 = vld [vmem:[%s4] sm:$0x3]
    %v217 = vlaneseq
    %v218 = vshrl.u32 %v217, 7
    %v219 = vsub.s32 0, %v218
    %v220 = vrot.slane %v215, %v219
    %v221 = vlaneseq
    %v222 = vshrl.u32 %v221, 7
    %v223 = vsub.s32 1, %v222
    %v224 = vrot.slane %v215, %v223
    %v259 = vunpack.c.l.b16 %v183
    %v260 = vunpack.c.h.b16 %v183
    %v261 = vunpack.c.l.b16 %v184
    %v262 = vunpack.c.h.b16 %v184
    %v263 = vunpack.c.l.b16 %v185
    %v264 = vunpack.c.h.b16 %v185
    %v265 = vunpack.c.l.b16 %v186
    %v266 = vunpack.c.h.b16 %v186
    %v267 = vunpack.c.l.b16 %v187
    %v268 = vunpack.c.h.b16 %v187
    %v269 = vunpack.c.l.b16 %v188
    %v270 = vunpack.c.h.b16 %v188
    %v271 = vunpack.c.l.b16 %v189
    %v272 = vunpack.c.h.b16 %v189
    %v273 = vunpack.c.l.b16 %v190
    %v274 = vunpack.c.h.b16 %v190
    %v275 = vunpack.c.l.b16 %v191
    %v276 = vunpack.c.h.b16 %v191
    %v277 = vunpack.c.l.b16 %v192
    %v278 = vunpack.c.h.b16 %v192
    %v279 = vunpack.c.l.b16 %v193
    %v280 = vunpack.c.h.b16 %v193
    %v281 = vunpack.c.l.b16 %v194
    %v282 = vunpack.c.h.b16 %v194
    %v283 = vunpack.c.l.b16 %v195
    %v284 = vunpack.c.h.b16 %v195
    %v285 = vunpack.c.l.b16 %v196
    %v286 = vunpack.c.h.b16 %v196
    %v287 = vunpack.c.l.b16 %v197
    %v288 = vunpack.c.h.b16 %v197
    %v289 = vunpack.c.l.b16 %v198
    %v290 = vunpack.c.h.b16 %v198
    %v291 = vunpack.c.l.b16 %v199
    %v292 = vunpack.c.h.b16 %v199
    %v293 = vunpack.c.l.b16 %v200
    %v294 = vunpack.c.h.b16 %v200
    %v295 = vunpack.c.l.b16 %v201
    %v296 = vunpack.c.h.b16 %v201
    %v297 = vunpack.c.l.b16 %v202
    %v298 = vunpack.c.h.b16 %v202
    %v299 = vunpack.c.l.b16 %v203
    %v300 = vunpack.c.h.b16 %v203
    %v301 = vunpack.c.l.b16 %v204
    %v302 = vunpack.c.h.b16 %v204
    %v303 = vunpack.c.l.b16 %v205
    %v304 = vunpack.c.h.b16 %v205
    %v305 = vunpack.c.l.b16 %v206
    %v306 = vunpack.c.h.b16 %v206
    %v307 = vunpack.c.l.b16 %v207
    %v308 = vunpack.c.h.b16 %v207
    %v309 = vunpack.c.l.b16 %v208
    %v310 = vunpack.c.h.b16 %v208
    %v311 = vunpack.c.l.b16 %v209
    %v312 = vunpack.c.h.b16 %v209
    %v313 = vunpack.c.l.b16 %v210
    %v314 = vunpack.c.h.b16 %v210
    %v315 = vunpack.c.l.b16 %v211
    %v316 = vunpack.c.h.b16 %v211
    %v317 = vunpack.c.l.b16 %v212
    %v318 = vunpack.c.h.b16 %v212
    %v319 = vunpack.c.l.b16 %v213
    %v320 = vunpack.c.h.b16 %v213
    %v321 = vunpack.c.l.b16 %v214
    %v322 = vunpack.c.h.b16 %v214
    %v323 = vpack.c.b16 %v261, %v259
    %v324 = vpack.c.b16 %v262, %v260
    %v325 = vpack.c.b16 %v265, %v263
    %v326 = vpack.c.b16 %v266, %v264
    %v327 = vpack.c.b16 %v269, %v267
    %v328 = vpack.c.b16 %v270, %v268
    %v329 = vpack.c.b16 %v273, %v271
    %v330 = vpack.c.b16 %v274, %v272
    %v331 = vpack.c.b16 %v277, %v275
    %v332 = vpack.c.b16 %v278, %v276
    %v333 = vpack.c.b16 %v281, %v279
    %v334 = vpack.c.b16 %v282, %v280
    %v335 = vpack.c.b16 %v285, %v283
    %v336 = vpack.c.b16 %v286, %v284
    %v337 = vpack.c.b16 %v289, %v287
    %v338 = vpack.c.b16 %v290, %v288
    %v339 = vpack.c.b16 %v293, %v291
    %v340 = vpack.c.b16 %v294, %v292
    %v341 = vpack.c.b16 %v297, %v295
    %v342 = vpack.c.b16 %v298, %v296
    %v343 = vpack.c.b16 %v301, %v299
    %v344 = vpack.c.b16 %v302, %v300
    %v345 = vpack.c.b16 %v305, %v303
    %v346 = vpack.c.b16 %v306, %v304
    %v347 = vpack.c.b16 %v309, %v307
    %v348 = vpack.c.b16 %v310, %v308
    %v349 = vpack.c.b16 %v313, %v311
    %v350 = vpack.c.b16 %v314, %v312
    %v351 = vpack.c.b16 %v317, %v315
    %v352 = vpack.c.b16 %v318, %v316
    %v353 = vpack.c.b16 %v321, %v319
    %v354 = vpack.c.b16 %v322, %v320
    %387 = vmatprep.subr.bf16.mxu0 %v338
    %388 = vmatpush1.bf16.msra.mxu0 %v337
    %389 = vmatprep.subr.bf16.mxu0 %v336
    %390 = vmatpush1.bf16.msra.mxu0 %v335
    %391 = vmatprep.subr.bf16.mxu0 %v334
    %392 = vmatpush1.bf16.msra.mxu0 %v333
    %393 = vmatprep.subr.bf16.mxu0 %v332
    %394 = vmatpush1.bf16.msra.mxu0 %v331
    %395 = vmatprep.subr.bf16.mxu0 %v330
    %396 = vmatpush1.bf16.msra.mxu0 %v329
    %397 = vmatprep.subr.bf16.mxu0 %v328
    %398 = vmatpush1.bf16.msra.mxu0 %v327
    %399 = vmatprep.subr.bf16.mxu0 %v326
    %400 = vmatpush1.bf16.msra.mxu0 %v325
    %401 = vmatprep.subr.bf16.mxu0 %v324
    %402 = vmatpush1.bf16.msra.mxu0 %v323
    %403 = vmatprep.subr.bf16.mxu0 %v354
    %404 = vmatpush2.bf16.msra.mxu0 %v353
    %405 = vmatprep.subr.bf16.mxu0 %v352
    %406 = vmatpush2.bf16.msra.mxu0 %v351
    %407 = vmatprep.subr.bf16.mxu0 %v350
    %408 = vmatpush2.bf16.msra.mxu0 %v349
    %409 = vmatprep.subr.bf16.mxu0 %v348
    %410 = vmatpush2.bf16.msra.mxu0 %v347
    %411 = vmatprep.subr.bf16.mxu0 %v346
    %412 = vmatpush2.bf16.msra.mxu0 %v345
    %413 = vmatprep.subr.bf16.mxu0 %v344
    %414 = vmatpush2.bf16.msra.mxu0 %v343
    %415 = vmatprep.subr.bf16.mxu0 %v342
    %416 = vmatpush2.bf16.msra.mxu0 %v341
    %417 = vmatprep.subr.bf16.mxu0 %v340
    %418 = vmatpush2.bf16.msra.mxu0 %v339
    %419 = vmatprep.mubr.bf16.mxu0 %v182
    %420 = vmatmul.mubr.bf16.gmra.mxu0 %v181
    %v421 = vpop.f32.mrf.mxu0
    %v422 = vadd.f32 %v220, %v421
    %v423 = vpop.f32.mrf.mxu0
    %v424 = vadd.f32 %v224, %v423
    %v425 = vpop.f32.mrf.mxu0
    %v426 = vadd.f32 %v220, %v425
    %v427 = vpop.f32.mrf.mxu0
    %v428 = vadd.f32 %v224, %v427
    %429 = vdwg.mxu0
    %vm430 = vcmp.gt.f32.partialorder %v422, 0.0
    %vm431 = vcmp.gt.f32.partialorder %v424, 0.0
    %vm432 = vcmp.gt.f32.partialorder %v426, 0.0
    %vm433 = vcmp.gt.f32.partialorder %v428, 0.0
    %v434 = vmul.f32 %v422, 0.01
    %v435 = vmul.f32 %v424, 0.01
    %v436 = vmul.f32 %v426, 0.01
    %v437 = vmul.f32 %v428, 0.01
    %v438 = vsel %vm430, %v422, %v434
    %v439 = vsel %vm431, %v424, %v435
    %v440 = vsel %vm432, %v426, %v436
    %v441 = vsel %vm433, %v428, %v437
    %v442 = vld [vmem:[%s5] sm:$0x3]
    %v443 = vlaneseq
    %v444 = vshrl.u32 %v443, 7
    %v445 = vsub.s32 0, %v444
    %v446 = vrot.slane %v442, %v445
    %v447 = vmul.f32 %v438, %v446
    %v448 = vmul.f32 %v440, %v446
    %449 = vadd.xlane.f32.xlu0 %v447
    %v450 = vpop.xlane.xlu0 %449
    %451 = vadd.xlane.f32.xlu0 %v448
    %v452 = vpop.xlane.xlu0 %451
    %s453 = sld [smem:[#allocation8]]
    %v454 = vstv %s453
    %v455 = vadd.f32 %v450, %v454
    %v456 = vadd.f32 %v452, %v454
    %v457 = vlaneseq
    %v458 = vshrl.u32 %v457, 7
    %v459 = vsub.s32 1, %v458
    %v460 = vrot.slane %v442, %v459
    %v461 = vmul.f32 %v439, %v460
    %v462 = vmul.f32 %v441, %v460
    %463 = vadd.xlane.f32.xlu0 %v461
    %v464 = vpop.xlane.xlu0 %463
    %465 = vadd.xlane.f32.xlu0 %v462
    %v466 = vpop.xlane.xlu0 %465
    %s467 = sld [smem:[#allocation8 + $0x1]]
    %v468 = vstv %s467
    %v469 = vadd.f32 %v464, %v468
    %v470 = vadd.f32 %v466, %v468
    %471 = vxpose.xlu0.b32.start [1/16] %v455, 128
    %472 = vxpose.xlu0.b32.cont [2/16] %v456, 128
    %473 = vxpose.xlu0.b32.cont [3/16] 0.0, 128
    %474 = vxpose.xlu0.b32.cont [4/16] 0.0, 128
    %475 = vxpose.xlu0.b32.cont [5/16] 0.0, 128
    %476 = vxpose.xlu0.b32.cont [6/16] 0.0, 128
    %477 = vxpose.xlu0.b32.cont [7/16] 0.0, 128
    %478 = vxpose.xlu0.b32.cont [8/16] 0.0, 128
    %479 = vxpose.xlu0.b32.cont [9/16] 0.0, 128
    %480 = vxpose.xlu0.b32.cont [10/16] 0.0, 128
    %481 = vxpose.xlu0.b32.cont [11/16] 0.0, 128
    %482 = vxpose.xlu0.b32.cont [12/16] 0.0, 128
    %483 = vxpose.xlu0.b32.cont [13/16] 0.0, 128
    %484 = vxpose.xlu0.b32.cont [14/16] 0.0, 128
    %485 = vxpose.xlu0.b32.cont [15/16] 0.0, 128
    %486 = vxpose.xlu0.b32.end [16/16] 0.0, 128
    %v487 = vpop.trf.xlu0
    %v488 = vpop.trf.xlu0
    %v489 = vpop.trf.xlu0
    %v490 = vpop.trf.xlu0
    %v491 = vpop.trf.xlu0
    %v492 = vpop.trf.xlu0
    %v493 = vpop.trf.xlu0
    %v494 = vpop.trf.xlu0
    %v495 = vpop.trf.xlu0
    %v496 = vpop.trf.xlu0
    %v497 = vpop.trf.xlu0
    %v498 = vpop.trf.xlu0
    %v499 = vpop.trf.xlu0
    %v500 = vpop.trf.xlu0
    %v501 = vpop.trf.xlu0
    %v502 = vpop.trf.xlu0
    %vm503 = vcmask 122880
    %504 = vst.msk [vmem:[%s7] sm:$0x1] %vm503, %v487
    %v505 = vxor.u32 %v469, 2147483648
    %v506 = vxor.u32 %v470, 2147483648
    %v507 = vmul.f32 %v505, 1.442695
    %v508 = vpow.pop %v507
    %v509 = vmul.f32 %v506, 1.442695
    %v510 = vpow.pop %v509
    %v511 = vadd.f32 %v508, 1.0
    %v512 = vadd.f32 %v510, 1.0
    %v513 = vrcp.pop %v511
    %v514 = vmul.f32 1.0, %v513
    %v515 = vrcp.pop %v512
    %v516 = vmul.f32 1.0, %v515
    %517 = vxpose.xlu0.b32.start [1/16] %v514, 128
    %518 = vxpose.xlu0.b32.cont [2/16] %v516, 128
    %519 = vxpose.xlu0.b32.cont [3/16] 0.0, 128
    %520 = vxpose.xlu0.b32.cont [4/16] 0.0, 128
    %521 = vxpose.xlu0.b32.cont [5/16] 0.0, 128
    %522 = vxpose.xlu0.b32.cont [6/16] 0.0, 128
    %523 = vxpose.xlu0.b32.cont [7/16] 0.0, 128
    %524 = vxpose.xlu0.b32.cont [8/16] 0.0, 128
    %525 = vxpose.xlu0.b32.cont [9/16] 0.0, 128
    %526 = vxpose.xlu0.b32.cont [10/16] 0.0, 128
    %527 = vxpose.xlu0.b32.cont [11/16] 0.0, 128
    %528 = vxpose.xlu0.b32.cont [12/16] 0.0, 128
    %529 = vxpose.xlu0.b32.cont [13/16] 0.0, 128
    %530 = vxpose.xlu0.b32.cont [14/16] 0.0, 128
    %531 = vxpose.xlu0.b32.cont [15/16] 0.0, 128
    %532 = vxpose.xlu0.b32.end [16/16] 0.0, 128
    %v533 = vpop.trf.xlu0
    %v534 = vpop.trf.xlu0
    %v535 = vpop.trf.xlu0
    %v536 = vpop.trf.xlu0
    %v537 = vpop.trf.xlu0
    %v538 = vpop.trf.xlu0
    %v539 = vpop.trf.xlu0
    %v540 = vpop.trf.xlu0
    %v541 = vpop.trf.xlu0
    %v542 = vpop.trf.xlu0
    %v543 = vpop.trf.xlu0
    %v544 = vpop.trf.xlu0
    %v545 = vpop.trf.xlu0
    %v546 = vpop.trf.xlu0
    %v547 = vpop.trf.xlu0
    %v548 = vpop.trf.xlu0
    %549 = vst.msk [vmem:[%s8] sm:$0x1] %vm503, %v533
    // Predicated region
    $region46: #{expr_decoder_forward.1} parent=1 // pred_check
      _
    $region47: #{expr_decoder_forward.1} parent=1 // pred_check_branch
      %551 = sbr.rel (0) target = $region49
    $region48: #{expr_decoder_forward.1} parent=1 // pred_region
      _
    $region49: #{expr_decoder_forward.1} parent=1 // pred_fallthru
      _
    // Predicated region
    $region50: #{expr_decoder_forward.1} parent=1 // pred_check
      _
    $region51: #{expr_decoder_forward.1} parent=1 // pred_check_branch
      %553 = sbr.rel (0) target = $region53
    $region52: #{expr_decoder_forward.1} parent=1 // pred_region
      _
    $region53: #{expr_decoder_forward.1} parent=1 // pred_fallthru
      _
    // Predicated region
    $region54: #{expr_decoder_forward.1} parent=1 // pred_check
      _
    $region55: #{expr_decoder_forward.1} parent=1 // pred_check_branch
      %555 = sbr.rel (0) target = $region57
    $region56: #{expr_decoder_forward.1} parent=1 // pred_region
      _
    $region57: #{expr_decoder_forward.1} parent=1 // pred_fallthru
      _
    // Predicated region
    $region58: #{expr_decoder_forward.1} parent=1 // pred_check
      _
    $region59: #{expr_decoder_forward.1} parent=1 // pred_check_branch
      %557 = sbr.rel (0) target = $region61
    $region60: #{expr_decoder_forward.1} parent=1 // pred_region
      _
    $region61: #{expr_decoder_forward.1} parent=1 // pred_fallthru
      _
    %558 = vsyncpa [#allocation3], 1
    %559 = vsyncpa [#allocation6], 1
    %560 = vsyncpa [#allocation4], 1

</llo_original>
